<compile_context>
chip_gen: v7x
topology: tpu7x:2x2x1
jax: 0.10.0
libtpu: 0.0.40
codegen_flags: <defaults>
</compile_context>

<pallas_src>
import functools

import jax
import jax.numpy as jnp
from jax.experimental import pallas as pl
from jax.experimental.pallas import tpu as pltpu


def _mlp_softmax_kernel(x_ref, w1_ref, b1_ref, w2_ref, b2_ref, w3_ref, b3_ref,
                        o_ref):
    # In-kernel bf16 cast of the x tile (VPU filler in a memory-bound kernel).
    x = x_ref[...].astype(jnp.bfloat16)
    # Layer 1: Linear (bf16 operands, f32 accumulate) + ReLU (f32)
    h = jnp.dot(x, w1_ref[...],
                preferred_element_type=jnp.float32) + b1_ref[...]
    h = jnp.maximum(h, 0.0)
    # Layer 2: Linear + ReLU
    h = jnp.dot(h.astype(jnp.bfloat16), w2_ref[...],
                preferred_element_type=jnp.float32) + b2_ref[...]
    h = jnp.maximum(h, 0.0)
    # Output layer: Linear -> (tile_b, out_size) logits
    logits = jnp.dot(h.astype(jnp.bfloat16), w3_ref[...],
                     preferred_element_type=jnp.float32) + b3_ref[...]
    # Numerically stable softmax over the last axis; divide goes to the EUP.
    m = jnp.max(logits, axis=-1, keepdims=True)
    e = jnp.exp(logits - m)
    denom = jnp.sum(e, axis=-1, keepdims=True)
    o_ref[...] = (e * pl.reciprocal(denom, approx=False)).astype(o_ref.dtype)


def _round_up(n, m):
    return ((n + m - 1) // m) * m


def _choose_tile_b(batch, block_b):
    """Batch tile: multiple of 16; >= 2 grid steps for large batches (v7x)."""
    tile = min(block_b, _round_up(batch, 16))
    if batch >= 512:
        tile = min(tile, _round_up(-(-batch // 2), 16))  # at least 2 steps
        tile = max(tile, 256)                            # keep MXU M fed
    return max(16, (tile // 16) * 16)


def prepare_params(params):
    """One-time weight prep: bf16 matmul operands, f32 biases."""
    bf = jnp.bfloat16
    return {
        "w1": params["w1"].astype(bf), "b1": params["b1"].astype(jnp.float32),
        "w2": params["w2"].astype(bf), "b2": params["b2"].astype(jnp.float32),
        "w3": params["w3"].astype(bf), "b3": params["b3"].astype(jnp.float32),
    }


@functools.partial(jax.jit, static_argnames=("block_b",))
def softmax_actor_forward(x, prepared, *, block_b=2048):
    """x: (B, input_size) float32. prepared: output of prepare_params()."""
    w1, b1 = prepared["w1"], prepared["b1"]
    w2, b2 = prepared["w2"], prepared["b2"]
    w3, b3 = prepared["w3"], prepared["b3"]
    B, in_size = x.shape
    out_size = w3.shape[1]

    tile_b = _choose_tile_b(B, block_b)
    b_pad = _round_up(B, tile_b)
    if b_pad != B:
        x = jnp.pad(x, ((0, b_pad - B), (0, 0)))

    n_tiles = b_pad // tile_b
    resident = lambda a: pl.BlockSpec(a.shape, lambda i: (0,) * a.ndim)

    out = pl.pallas_call(
        _mlp_softmax_kernel,
        out_shape=jax.ShapeDtypeStruct((b_pad, out_size), jnp.float32),
        grid=(n_tiles,),
        in_specs=[
            pl.BlockSpec((tile_b, in_size), lambda i: (i, 0)),   # x: tiled rows
            resident(w1), resident(b1),                          # weights/biases
            resident(w2), resident(b2),                          # stay VMEM-resident
            resident(w3), resident(b3),
        ],
        out_specs=pl.BlockSpec((tile_b, out_size), lambda i: (i, 0)),
        compiler_params=pltpu.CompilerParams(
            dimension_semantics=("parallel",)),
    )(x, w1, b1, w2, b2, w3, b3)

    return out if b_pad == B else out[:B]


def init_params(key, input_size, hidden_sizes, output_size):
    """Deterministic synthetic init (uniform, like torch default scale)."""
    sizes = [input_size] + list(hidden_sizes) + [output_size]
    params = {}
    keys = jax.random.split(key, 2 * (len(sizes) - 1))
    for i in range(len(sizes) - 1):
        fan_in, fan_out = sizes[i], sizes[i + 1]
        bound = 1.0 / jnp.sqrt(fan_in)
        params[f"w{i+1}"] = jax.random.uniform(
            keys[2 * i], (fan_in, fan_out), jnp.float32, -bound, bound)
        params[f"b{i+1}"] = jax.random.uniform(
            keys[2 * i + 1], (1, fan_out), jnp.float32, -bound, bound)
    return params


def _reference_bf16(x, p):
    """Reference with the same bf16 matmul operands / f32 accumulation."""
    bf = jnp.bfloat16
    h = jnp.dot(x.astype(bf), p["w1"].astype(bf),
                preferred_element_type=jnp.float32) + p["b1"]
    h = jnp.maximum(h, 0.0)
    h = jnp.dot(h.astype(bf), p["w2"].astype(bf),
                preferred_element_type=jnp.float32) + p["b2"]
    h = jnp.maximum(h, 0.0)
    logits = jnp.dot(h.astype(bf), p["w3"].astype(bf),
                     preferred_element_type=jnp.float32) + p["b3"]
    return jax.nn.softmax(logits, axis=-1)


def _reference_f32(x, p):
    h = jnp.maximum(x @ p["w1"] + p["b1"], 0.0)
    h = jnp.maximum(h @ p["w2"] + p["b2"], 0.0)
    return jax.nn.softmax(h @ p["w3"] + p["b3"], axis=-1)


if __name__ == "__main__":
    key = jax.random.PRNGKey(0)
    k_x, k_p = jax.random.split(key)

    batch = 24
    input_size = 16
    hidden_sizes = [32, 32]
    output_size = 8

    x = jax.random.normal(k_x, (batch, input_size), jnp.float32)
    params = init_params(k_p, input_size, hidden_sizes, output_size)
    prepared = prepare_params(params)

    # Small block_b so the demo actually exercises multiple grid steps.
    out = softmax_actor_forward(x, prepared, block_b=16)
    out = jax.block_until_ready(out)

    assert out.shape == (batch, output_size)
    ref_bf = _reference_bf16(x, params)
    ref_f32 = _reference_f32(x, params)
    assert jnp.allclose(out, ref_bf, atol=2e-3, rtol=2e-3), \
        float(jnp.max(jnp.abs(out - ref_bf)))
    assert jnp.allclose(out, ref_f32, atol=2e-2, rtol=2e-2)
    assert jnp.allclose(jnp.sum(out, axis=-1), 1.0, atol=1e-3)

    print("KERNEL_OK")
</pallas_src>

<mosaic_0001>
module attributes {stable_mosaic.version = 11 : i64} {
  func.func @_mlp_softmax_kernel(%arg0: i32, %arg1: memref<16x16xf32, #tpu.memory_space<vmem>>, %arg2: memref<16x32xbf16, #tpu.memory_space<vmem>>, %arg3: memref<1x32xf32, #tpu.memory_space<vmem>>, %arg4: memref<32x32xbf16, #tpu.memory_space<vmem>>, %arg5: memref<1x32xf32, #tpu.memory_space<vmem>>, %arg6: memref<32x8xbf16, #tpu.memory_space<vmem>>, %arg7: memref<1x8xf32, #tpu.memory_space<vmem>>, %arg8: memref<16x8xf32, #tpu.memory_space<vmem>>) attributes {dimension_semantics = [#tpu.dimension_semantics<parallel>], iteration_bounds = array<i64: 2>, scalar_prefetch = 0 : i64, scratch_operands = 0 : i64, tpu.core_type = #tpu.core_type<tc>, window_params = [{transform_indices = @transform_0, window_bounds = array<i64: 16, 16>}, {pipeline_mode = #tpu.pipeline_mode<synchronous>, transform_indices = @transform_1, window_bounds = array<i64: 16, 32>}, {pipeline_mode = #tpu.pipeline_mode<synchronous>, transform_indices = @transform_2, window_bounds = array<i64: 1, 32>}, {pipeline_mode = #tpu.pipeline_mode<synchronous>, transform_indices = @transform_3, window_bounds = array<i64: 32, 32>}, {pipeline_mode = #tpu.pipeline_mode<synchronous>, transform_indices = @transform_4, window_bounds = array<i64: 1, 32>}, {pipeline_mode = #tpu.pipeline_mode<synchronous>, transform_indices = @transform_5, window_bounds = array<i64: 32, 8>}, {pipeline_mode = #tpu.pipeline_mode<synchronous>, transform_indices = @transform_6, window_bounds = array<i64: 1, 8>}, {transform_indices = @transform_7, window_bounds = array<i64: 16, 8>}]} {
    %c0 = arith.constant 0 : index
    %c0_0 = arith.constant 0 : index
    %0 = vector.load %arg1[%c0, %c0_0] : memref<16x16xf32, #tpu.memory_space<vmem>>, vector<16x16xf32>
    %1 = arith.truncf %0 : vector<16x16xf32> to vector<16x16xbf16>
    %c0_1 = arith.constant 0 : index
    %c0_2 = arith.constant 0 : index
    %2 = vector.load %arg2[%c0_1, %c0_2] : memref<16x32xbf16, #tpu.memory_space<vmem>>, vector<16x32xbf16>
    %cst = arith.constant dense<0.000000e+00> : vector<16x32xf32>
    %3 = tpu.matmul %1, %2, %cst {dimension_numbers = #tpu.dot_dimension_numbers<[1], [0], [0], [1], [0, 0, 1, 1], [], []>} : vector<16x16xbf16>, vector<16x32xbf16>, vector<16x32xf32> -> vector<16x32xf32>
    %c0_3 = arith.constant 0 : index
    %c0_4 = arith.constant 0 : index
    %4 = vector.load %arg3[%c0_3, %c0_4] : memref<1x32xf32, #tpu.memory_space<vmem>>, vector<1x32xf32>
    %5 = vector.broadcast %4 : vector<1x32xf32> to vector<16x32xf32>
    %6 = arith.addf %3, %5 : vector<16x32xf32>
    %cst_5 = arith.constant 0.000000e+00 : f32
    %7 = vector.broadcast %cst_5 : f32 to vector<16x32xf32>
    %8 = arith.maximumf %6, %7 : vector<16x32xf32>
    %9 = arith.truncf %8 : vector<16x32xf32> to vector<16x32xbf16>
    %c0_6 = arith.constant 0 : index
    %c0_7 = arith.constant 0 : index
    %10 = vector.load %arg4[%c0_6, %c0_7] : memref<32x32xbf16, #tpu.memory_space<vmem>>, vector<32x32xbf16>
    %cst_8 = arith.constant dense<0.000000e+00> : vector<16x32xf32>
    %11 = tpu.matmul %9, %10, %cst_8 {dimension_numbers = #tpu.dot_dimension_numbers<[1], [0], [0], [1], [0, 0, 1, 1], [], []>} : vector<16x32xbf16>, vector<32x32xbf16>, vector<16x32xf32> -> vector<16x32xf32>
    %c0_9 = arith.constant 0 : index
    %c0_10 = arith.constant 0 : index
    %12 = vector.load %arg5[%c0_9, %c0_10] : memref<1x32xf32, #tpu.memory_space<vmem>>, vector<1x32xf32>
    %13 = vector.broadcast %12 : vector<1x32xf32> to vector<16x32xf32>
    %14 = arith.addf %11, %13 : vector<16x32xf32>
    %cst_11 = arith.constant 0.000000e+00 : f32
    %15 = vector.broadcast %cst_11 : f32 to vector<16x32xf32>
    %16 = arith.maximumf %14, %15 : vector<16x32xf32>
    %17 = arith.truncf %16 : vector<16x32xf32> to vector<16x32xbf16>
    %c0_12 = arith.constant 0 : index
    %c0_13 = arith.constant 0 : index
    %18 = vector.load %arg6[%c0_12, %c0_13] : memref<32x8xbf16, #tpu.memory_space<vmem>>, vector<32x8xbf16>
    %cst_14 = arith.constant dense<0.000000e+00> : vector<16x8xf32>
    %19 = tpu.matmul %17, %18, %cst_14 {dimension_numbers = #tpu.dot_dimension_numbers<[1], [0], [0], [1], [0, 0, 1, 1], [], []>} : vector<16x32xbf16>, vector<32x8xbf16>, vector<16x8xf32> -> vector<16x8xf32>
    %c0_15 = arith.constant 0 : index
    %c0_16 = arith.constant 0 : index
    %20 = vector.load %arg7[%c0_15, %c0_16] : memref<1x8xf32, #tpu.memory_space<vmem>>, vector<1x8xf32>
    %21 = vector.broadcast %20 : vector<1x8xf32> to vector<16x8xf32>
    %22 = arith.addf %19, %21 : vector<16x8xf32>
    %cst_17 = arith.constant dense<0xFF800000> : vector<16xf32>
    %23 = vector.multi_reduction <maximumf>, %22, %cst_17 [1] : vector<16x8xf32> to vector<16xf32>
    %24 = vector.shape_cast %23 : vector<16xf32> to vector<16x1xf32>
    %25 = vector.broadcast %24 : vector<16x1xf32> to vector<16x8xf32>
    %26 = arith.subf %22, %25 : vector<16x8xf32>
    %27 = math.exp %26 : vector<16x8xf32>
    %cst_18 = arith.constant dense<0.000000e+00> : vector<16xf32>
    %28 = vector.multi_reduction <add>, %27, %cst_18 [1] : vector<16x8xf32> to vector<16xf32>
    %29 = vector.shape_cast %28 : vector<16xf32> to vector<16x1xf32>
    %30 = tpu.reciprocal %29 : vector<16x1xf32> -> vector<16x1xf32>
    %31 = vector.broadcast %30 : vector<16x1xf32> to vector<16x8xf32>
    %32 = arith.mulf %27, %31 : vector<16x8xf32>
    %c0_19 = arith.constant 0 : index
    %c0_20 = arith.constant 0 : index
    %33 = vector.load %arg8[%c0_19, %c0_20] : memref<16x8xf32, #tpu.memory_space<vmem>>, vector<16x8xf32>
    tpu.vector_store %arg8[%c0_19, %c0_20], %32 {strides = array<i32>} : memref<16x8xf32, #tpu.memory_space<vmem>>, vector<16x8xf32>,
    return
  }
  func.func @transform_0(%arg0: i32) -> (i32, i32) {
    %c0_i32 = arith.constant 0 : i32
    %c0_i32_0 = arith.constant 0 : i32
    return %arg0, %c0_i32 : i32, i32
  }
  func.func @transform_1(%arg0: i32) -> (i32, i32) {
    %c0_i32 = arith.constant 0 : i32
    %c0_i32_0 = arith.constant 0 : i32
    %c0_i32_1 = arith.constant 0 : i32
    return %c0_i32, %c0_i32_0 : i32, i32
  }
  func.func @transform_2(%arg0: i32) -> (i32, i32) {
    %c0_i32 = arith.constant 0 : i32
    %c0_i32_0 = arith.constant 0 : i32
    %c0_i32_1 = arith.constant 0 : i32
    return %c0_i32, %c0_i32_0 : i32, i32
  }
  func.func @transform_3(%arg0: i32) -> (i32, i32) {
    %c0_i32 = arith.constant 0 : i32
    %c0_i32_0 = arith.constant 0 : i32
    %c0_i32_1 = arith.constant 0 : i32
    return %c0_i32, %c0_i32_0 : i32, i32
  }
  func.func @transform_4(%arg0: i32) -> (i32, i32) {
    %c0_i32 = arith.constant 0 : i32
    %c0_i32_0 = arith.constant 0 : i32
    %c0_i32_1 = arith.constant 0 : i32
    return %c0_i32, %c0_i32_0 : i32, i32
  }
  func.func @transform_5(%arg0: i32) -> (i32, i32) {
    %c0_i32 = arith.constant 0 : i32
    %c0_i32_0 = arith.constant 0 : i32
    %c0_i32_1 = arith.constant 0 : i32
    return %c0_i32, %c0_i32_0 : i32, i32
  }
  func.func @transform_6(%arg0: i32) -> (i32, i32) {
    %c0_i32 = arith.constant 0 : i32
    %c0_i32_0 = arith.constant 0 : i32
    %c0_i32_1 = arith.constant 0 : i32
    return %c0_i32, %c0_i32_0 : i32, i32
  }
  func.func @transform_7(%arg0: i32) -> (i32, i32) {
    %c0_i32 = arith.constant 0 : i32
    %c0_i32_0 = arith.constant 0 : i32
    return %arg0, %c0_i32 : i32, i32
  }
}

</mosaic_0001>

<llo_original>
// kernel: softmax_actor_forward.1
$region0: #{softmax_actor_forward.1}
  #allocation0 [shape = 'u32[]', space=smem, size = 0x4, offset = 0x4, fixed_abs, tag = 'smem constant byte address 0x4 - core index']
  #allocation1 [shape = 'u32[144,128]{1,0:T(1,128)}', space=vmem, size = 0x12000, scoped, tag = 'internal scratch']
  %s0 = inlined_call_operand.vmem [shape: f32[32,16], index: 0, kind: input, shape index: {}]
  %s1 = inlined_call_operand.vmem [shape: bf16[16,32], index: 1, kind: input, shape index: {}]
  %s2 = inlined_call_operand.vmem [shape: f32[1,32], index: 2, kind: input, shape index: {}]
  %s3 = inlined_call_operand.vmem [shape: bf16[32,32], index: 3, kind: input, shape index: {}]
  %s4 = inlined_call_operand.vmem [shape: f32[1,32], index: 4, kind: input, shape index: {}]
  %s5 = inlined_call_operand.vmem [shape: bf16[32,8], index: 5, kind: input, shape index: {}]
  %s6 = inlined_call_operand.vmem [shape: f32[1,8], index: 6, kind: input, shape index: {}]
  %s7 = inlined_call_operand.vmem [shape: f32[32,8], index: 7, kind: output, shape index: {}]
  %s8 = sld [smem:[#allocation0]]
  $region61: #{softmax_actor_forward.1} parent=0
    _
  %s10 = ssub.s32 1, %s8
  %s11 = scalar_select 0, %s10, %s8
  loop: start=0, step=1, limit=4
  $region2: #{softmax_actor_forward.1} parent=0 // loop_pre_header
    _
  $region3: #{softmax_actor_forward.1} parent=0 // loop_header
    %s13 = sphi 0, %s17
    %p14 = scmp.ge.s32.totalorder %s13, 4
    %s23 = sphi 0, %s25
    %s26 = sphi 0, %s23
    %s27 = sphi 0, %s26
    %s43 = sphi 0, %s27
    %s47 = sphi 0, %s47
    %s49 = sphi 0, %s47
    %s50 = sphi 0, %s49
    %s64 = sphi 0, %s50
    %s68 = sphi 0, %s68
    %s70 = sphi 0, %s68
    %s71 = sphi 0, %s70
    %s85 = sphi 0, %s71
    %s89 = sphi 0, %s89
    %s91 = sphi 0, %s89
    %s92 = sphi 0, %s91
    %s106 = sphi 0, %s92
    %s110 = sphi 0, %s110
    %s112 = sphi 0, %s110
    %s113 = sphi 0, %s112
    %s127 = sphi 0, %s113
    %s131 = sphi 0, %s131
    %s133 = sphi 0, %s131
    %s134 = sphi 0, %s133
    %s148 = sphi 0, %s134
    %s152 = sphi 0, %s152
    %s154 = sphi 0, %s152
    %s155 = sphi 0, %s154
    %s169 = sphi 0, %s155
    %s175 = sphi 0, %s177
    %s178 = sphi 0, %s175
    %s179 = sphi 0, %s178
    %s195 = sphi 0, %s179
  $region4: #{softmax_actor_forward.1} parent=0 // loop_header_branch
    %16 = sbr.rel (%p14) target = $region8
  $region5: #{softmax_actor_forward.1} parent=0 // loop_body
    %s18 = ssub.s32 %s13, 1
    %s19 = ssub.s32 %s13, 2
    %s20 = sadd.s32 %s13, 1
    %s21 = ssub.s32 %s13, %s20
    %p22 = scmp.eq.s32.totalorder %s21, 0
    %s24 = sadd.s32 %s23, 1
    %s25 = scalar_select %p22, %s23, %s24
    %p28 = pneg %p22
    %p29 = scmp.eq.s32.totalorder %s13, 1
    %p30 = por %p28, %p29
    %p31 = scmp.ne.s32.totalorder %s23, %s26
    %p32 = scmp.eq.s32.totalorder %s13, 0
    %p33 = por %p31, %p32
    %p34 = scmp.ne.s32.totalorder %s23, %s26
    %p35 = scmp.eq.s32.totalorder %s18, 1
    %p36 = por %p34, %p35
    %p37 = scmp.ne.s32.totalorder %s26, %s27
    %p38 = scmp.eq.s32.totalorder %s18, 0
    %p39 = por %p37, %p38
    %p40 = scmp.ne.s32.totalorder %s26, %s27
    %p41 = scmp.eq.s32.totalorder %s19, 1
    %p42 = por %p40, %p41
    %p44 = scmp.ne.s32.totalorder %s27, %s43
    %p45 = scmp.eq.s32.totalorder %s19, 0
    %p46 = por %p44, %p45
    %s48 = sadd.s32 %s47, 1
    %p51 = scmp.eq.s32.totalorder %s13, 1
    %p52 = scmp.ne.s32.totalorder %s47, %s49
    %p53 = scmp.eq.s32.totalorder %s13, 0
    %p54 = por %p52, %p53
    %p55 = scmp.ne.s32.totalorder %s47, %s49
    %p56 = scmp.eq.s32.totalorder %s18, 1
    %p57 = por %p55, %p56
    %p58 = scmp.ne.s32.totalorder %s49, %s50
    %p59 = scmp.eq.s32.totalorder %s18, 0
    %p60 = por %p58, %p59
    %p61 = scmp.ne.s32.totalorder %s49, %s50
    %p62 = scmp.eq.s32.totalorder %s19, 1
    %p63 = por %p61, %p62
    %p65 = scmp.ne.s32.totalorder %s50, %s64
    %p66 = scmp.eq.s32.totalorder %s19, 0
    %p67 = por %p65, %p66
    %s69 = sadd.s32 %s68, 1
    %p72 = scmp.eq.s32.totalorder %s13, 1
    %p73 = scmp.ne.s32.totalorder %s68, %s70
    %p74 = scmp.eq.s32.totalorder %s13, 0
    %p75 = por %p73, %p74
    %p76 = scmp.ne.s32.totalorder %s68, %s70
    %p77 = scmp.eq.s32.totalorder %s18, 1
    %p78 = por %p76, %p77
    %p79 = scmp.ne.s32.totalorder %s70, %s71
    %p80 = scmp.eq.s32.totalorder %s18, 0
    %p81 = por %p79, %p80
    %p82 = scmp.ne.s32.totalorder %s70, %s71
    %p83 = scmp.eq.s32.totalorder %s19, 1
    %p84 = por %p82, %p83
    %p86 = scmp.ne.s32.totalorder %s71, %s85
    %p87 = scmp.eq.s32.totalorder %s19, 0
    %p88 = por %p86, %p87
    %s90 = sadd.s32 %s89, 1
    %p93 = scmp.eq.s32.totalorder %s13, 1
    %p94 = scmp.ne.s32.totalorder %s89, %s91
    %p95 = scmp.eq.s32.totalorder %s13, 0
    %p96 = por %p94, %p95
    %p97 = scmp.ne.s32.totalorder %s89, %s91
    %p98 = scmp.eq.s32.totalorder %s18, 1
    %p99 = por %p97, %p98
    %p100 = scmp.ne.s32.totalorder %s91, %s92
    %p101 = scmp.eq.s32.totalorder %s18, 0
    %p102 = por %p100, %p101
    %p103 = scmp.ne.s32.totalorder %s91, %s92
    %p104 = scmp.eq.s32.totalorder %s19, 1
    %p105 = por %p103, %p104
    %p107 = scmp.ne.s32.totalorder %s92, %s106
    %p108 = scmp.eq.s32.totalorder %s19, 0
    %p109 = por %p107, %p108
    %s111 = sadd.s32 %s110, 1
    %p114 = scmp.eq.s32.totalorder %s13, 1
    %p115 = scmp.ne.s32.totalorder %s110, %s112
    %p116 = scmp.eq.s32.totalorder %s13, 0
    %p117 = por %p115, %p116
    %p118 = scmp.ne.s32.totalorder %s110, %s112
    %p119 = scmp.eq.s32.totalorder %s18, 1
    %p120 = por %p118, %p119
    %p121 = scmp.ne.s32.totalorder %s112, %s113
    %p122 = scmp.eq.s32.totalorder %s18, 0
    %p123 = por %p121, %p122
    %p124 = scmp.ne.s32.totalorder %s112, %s113
    %p125 = scmp.eq.s32.totalorder %s19, 1
    %p126 = por %p124, %p125
    %p128 = scmp.ne.s32.totalorder %s113, %s127
    %p129 = scmp.eq.s32.totalorder %s19, 0
    %p130 = por %p128, %p129
    %s132 = sadd.s32 %s131, 1
    %p135 = scmp.eq.s32.totalorder %s13, 1
    %p136 = scmp.ne.s32.totalorder %s131, %s133
    %p137 = scmp.eq.s32.totalorder %s13, 0
    %p138 = por %p136, %p137
    %p139 = scmp.ne.s32.totalorder %s131, %s133
    %p140 = scmp.eq.s32.totalorder %s18, 1
    %p141 = por %p139, %p140
    %p142 = scmp.ne.s32.totalorder %s133, %s134
    %p143 = scmp.eq.s32.totalorder %s18, 0
    %p144 = por %p142, %p143
    %p145 = scmp.ne.s32.totalorder %s133, %s134
    %p146 = scmp.eq.s32.totalorder %s19, 1
    %p147 = por %p145, %p146
    %p149 = scmp.ne.s32.totalorder %s134, %s148
    %p150 = scmp.eq.s32.totalorder %s19, 0
    %p151 = por %p149, %p150
    %s153 = sadd.s32 %s152, 1
    %p156 = scmp.eq.s32.totalorder %s13, 1
    %p157 = scmp.ne.s32.totalorder %s152, %s154
    %p158 = scmp.eq.s32.totalorder %s13, 0
    %p159 = por %p157, %p158
    %p160 = scmp.ne.s32.totalorder %s152, %s154
    %p161 = scmp.eq.s32.totalorder %s18, 1
    %p162 = por %p160, %p161
    %p163 = scmp.ne.s32.totalorder %s154, %s155
    %p164 = scmp.eq.s32.totalorder %s18, 0
    %p165 = por %p163, %p164
    %p166 = scmp.ne.s32.totalorder %s154, %s155
    %p167 = scmp.eq.s32.totalorder %s19, 1
    %p168 = por %p166, %p167
    %p170 = scmp.ne.s32.totalorder %s155, %s169
    %p171 = scmp.eq.s32.totalorder %s19, 0
    %p172 = por %p170, %p171
    %s173 = ssub.s32 %s13, %s20
    %p174 = scmp.eq.s32.totalorder %s173, 0
    %s176 = sadd.s32 %s175, 1
    %s177 = scalar_select %p174, %s175, %s176
    %p180 = pneg %p174
    %p181 = scmp.eq.s32.totalorder %s13, 1
    %p182 = por %p180, %p181
    %p183 = scmp.ne.s32.totalorder %s175, %s178
    %p184 = scmp.eq.s32.totalorder %s13, 0
    %p185 = por %p183, %p184
    %p186 = scmp.ne.s32.totalorder %s175, %s178
    %p187 = scmp.eq.s32.totalorder %s18, 1
    %p188 = por %p186, %p187
    %p189 = scmp.ne.s32.totalorder %s178, %s179
    %p190 = scmp.eq.s32.totalorder %s18, 0
    %p191 = por %p189, %p190
    %p192 = scmp.ne.s32.totalorder %s178, %s179
    %p193 = scmp.eq.s32.totalorder %s19, 1
    %p194 = por %p192, %p193
    %p196 = scmp.ne.s32.totalorder %s179, %s195
    %p197 = scmp.eq.s32.totalorder %s19, 0
    %p198 = por %p196, %p197
    %p199 = scmp.le.s32.totalorder 1, %s13
    %p200 = scmp.lt.s32.totalorder %s13, 3
    %p201 = pnand %p199, %p200
    %p202 = pneg %p201
    // Predicated region
    $region9: #{softmax_actor_forward.1} parent=5 // pred_check
      _
    $region10: #{softmax_actor_forward.1} parent=5 // pred_check_branch
      %204 = sbr.rel (%p201) target = $region12
    $region11: #{softmax_actor_forward.1} parent=5 // pred_region
      %s205 = ssub.s32 %s13, 1
      // Predicated region
      $region13: #{softmax_actor_forward.1} parent=11 // pred_check
        %p206 = pneg %p60
      $region14: #{softmax_actor_forward.1} parent=11 // pred_check_branch
        %208 = sbr.rel (%p206) target = $region16
      $region15: #{softmax_actor_forward.1} parent=11 // pred_region
        _
      $region16: #{softmax_actor_forward.1} parent=11 // pred_fallthru
        _
      // Predicated region
      $region17: #{softmax_actor_forward.1} parent=11 // pred_check
        %p209 = pneg %p81
      $region18: #{softmax_actor_forward.1} parent=11 // pred_check_branch
        %211 = sbr.rel (%p209) target = $region20
      $region19: #{softmax_actor_forward.1} parent=11 // pred_region
        _
      $region20: #{softmax_actor_forward.1} parent=11 // pred_fallthru
        _
      // Predicated region
      $region21: #{softmax_actor_forward.1} parent=11 // pred_check
        %p212 = pneg %p102
      $region22: #{softmax_actor_forward.1} parent=11 // pred_check_branch
        %214 = sbr.rel (%p212) target = $region24
      $region23: #{softmax_actor_forward.1} parent=11 // pred_region
        _
      $region24: #{softmax_actor_forward.1} parent=11 // pred_fallthru
        _
      // Predicated region
      $region25: #{softmax_actor_forward.1} parent=11 // pred_check
        %p215 = pneg %p123
      $region26: #{softmax_actor_forward.1} parent=11 // pred_check_branch
        %217 = sbr.rel (%p215) target = $region28
      $region27: #{softmax_actor_forward.1} parent=11 // pred_region
        _
      $region28: #{softmax_actor_forward.1} parent=11 // pred_fallthru
        _
      // Predicated region
      $region29: #{softmax_actor_forward.1} parent=11 // pred_check
        %p218 = pneg %p144
      $region30: #{softmax_actor_forward.1} parent=11 // pred_check_branch
        %220 = sbr.rel (%p218) target = $region32
      $region31: #{softmax_actor_forward.1} parent=11 // pred_region
        _
      $region32: #{softmax_actor_forward.1} parent=11 // pred_fallthru
        _
      // Predicated region
      $region33: #{softmax_actor_forward.1} parent=11 // pred_check
        %p221 = pneg %p165
      $region34: #{softmax_actor_forward.1} parent=11 // pred_check_branch
        %223 = sbr.rel (%p221) target = $region36
      $region35: #{softmax_actor_forward.1} parent=11 // pred_region
        _
      $region36: #{softmax_actor_forward.1} parent=11 // pred_fallthru
        _
    $region12: #{softmax_actor_forward.1} parent=5 // pred_fallthru
      _
    %p224 = scmp.lt.s32.totalorder %s13, 2
    // Predicated region
    $region37: #{softmax_actor_forward.1} parent=5 // pred_check
      %p225 = pneg %p224
    $region38: #{softmax_actor_forward.1} parent=5 // pred_check_branch
      %227 = sbr.rel (%p225) target = $region40
    $region39: #{softmax_actor_forward.1} parent=5 // pred_region
      // Predicated region
      $region41: #{softmax_actor_forward.1} parent=39 // pred_check
        %p228 = pneg %p33
      $region42: #{softmax_actor_forward.1} parent=39 // pred_check_branch
        %230 = sbr.rel (%p228) target = $region44
      $region43: #{softmax_actor_forward.1} parent=39 // pred_region
        %s231 = smul.u32 2, %s13
        %p232 = scmp.lt.s32.totalorder %s231, 3
        %s233 = scalar_select %p232, %s231, 3
        %s234 = smul.addr %s233, 8
        %s235 = scalar_lea.vmem %s0, %s234
        %s236 = smul.u32 2, %s13
      $region44: #{softmax_actor_forward.1} parent=39 // pred_fallthru
        _
    $region40: #{softmax_actor_forward.1} parent=5 // pred_fallthru
      _
    %p237 = scmp.le.s32.totalorder 1, %s13
    %p238 = scmp.lt.s32.totalorder %s13, 3
    %p239 = pnand %p237, %p238
    %p240 = pneg %p239
    // Predicated region
    $region45: #{softmax_actor_forward.1} parent=5 // pred_check
      _
    $region46: #{softmax_actor_forward.1} parent=5 // pred_check_branch
      %242 = sbr.rel (%p239) target = $region48
    $region47: #{softmax_actor_forward.1} parent=5 // pred_region
      %s243 = ssub.s32 %s13, 1
      %s244 = smul.u32 2, %s18
      %p245 = scmp.lt.s32.totalorder %s244, 3
      %s246 = scalar_select %p245, %s244, 3
      %s247 = smul.addr %s246, 8
      %s248 = scalar_lea.vmem %s0, %s247
      %p249 = pneg %p39
      %p250 = pneg %p36
      %p251 = pneg %p60
      %p252 = pneg %p57
      %p253 = pneg %p81
      %p254 = pneg %p78
      %p255 = pneg %p102
      %p256 = pneg %p99
      %p257 = pneg %p123
      %p258 = pneg %p120
      %p259 = pneg %p144
      %p260 = pneg %p141
      %p261 = pneg %p165
      %p262 = pneg %p162
      %p263 = pneg %p191
      %p264 = pneg %p188
      %s265 = smul.u32 2, %s18
      %p266 = scmp.lt.s32.totalorder %s265, 3
      %s267 = scalar_select %p266, %s265, 3
      %s268 = smul.addr %s267, 8
      %s269 = scalar_lea.vmem %s7, %s268
      %s270 = smul.u32 2, %s18
      %p271 = scmp.lt.s32.totalorder %s270, 3
      %s272 = scalar_select %p271, %s270, 3
      %s273 = smul.addr %s272, 8
      %s274 = scalar_lea.vmem %s0, %s273
      %s275 = smul.u32 2, %s18
      %s276 = smul.u32 2, %s18
      %p277 = scmp.lt.s32.totalorder %s276, 3
      %s278 = scalar_select %p277, %s276, 3
      %s279 = smul.addr %s278, 8
      %s280 = scalar_lea.vmem %s7, %s279
      %s281 = smul.u32 2, %s18
      %v283 = vld [vmem:[%s274] sm:$0xff]
      %v284 = vld [vmem:[%s274 + $0x8] sm:$0xff]
      %v285 = vpack.c.bf16 %v284, %v283
      %v286 = vld [vmem:[%s1] sm:$0xf]
      %v287 = vld [vmem:[%s1 + $0x4] sm:$0xf]
      %v288 = vld [vmem:[%s2] sm:$0x1]
      %v290 = vlaneseq
      %v291 = vshrl.u32 %v290, 7
      %v292 = vsub.s32 0, %v291
      %v293 = vrot.slane %v288, %v292
      %v297 = vunpack.c.l.b16 %v286
      %v298 = vunpack.c.l.b16 %v287
      %v299 = vpack.c.b16 %v298, %v297
      %vm301 = vcmask 130048
      %v303 = vsel %vm301, %v285, 0
      %305 = vmatprep.subr.bf16.mxu0 0
      %306 = vmatpush1.bf16.msra.mxu0 %v299
      %307 = vmatprep.subr.bf16.mxu0 0
      %308 = vmatpush1.bf16.msra.mxu0 0
      %309 = vmatprep.subr.bf16.mxu0 0
      %310 = vmatpush1.bf16.msra.mxu0 0
      %311 = vmatprep.subr.bf16.mxu0 0
      %312 = vmatpush1.bf16.msra.mxu0 0
      %313 = vmatprep.subr.bf16.mxu0 0
      %314 = vmatpush1.bf16.msra.mxu0 0
      %315 = vmatprep.subr.bf16.mxu0 0
      %316 = vmatpush1.bf16.msra.mxu0 0
      %317 = vmatprep.subr.bf16.mxu0 0
      %318 = vmatpush1.bf16.msra.mxu0 0
      %319 = vmatprep.subr.bf16.mxu0 0
      %320 = vmatpush1.bf16.msra.mxu0 0
      %321 = vmatprep.subr.bf16.mxu0 0
      %322 = vmatpush1.bf16.msra.mxu0 0
      %323 = vmatprep.subr.bf16.mxu0 0
      %324 = vmatpush1.bf16.msra.mxu0 0
      %325 = vmatprep.subr.bf16.mxu0 0
      %326 = vmatpush1.bf16.msra.mxu0 0
      %327 = vmatprep.subr.bf16.mxu0 0
      %328 = vmatpush1.bf16.msra.mxu0 0
      %329 = vmatprep.subr.bf16.mxu0 0
      %330 = vmatpush1.bf16.msra.mxu0 0
      %331 = vmatprep.subr.bf16.mxu0 0
      %332 = vmatpush1.bf16.msra.mxu0 0
      %333 = vmatprep.subr.bf16.mxu0 0
      %334 = vmatpush1.bf16.msra.mxu0 0
      %335 = vmatprep.subr.bf16.mxu0 0
      %336 = vmatpush1.bf16.msra.mxu0 0
      %337 = vmatprep.mubr.bf16.mxu0 0
      %338 = vmatmul.mubr.bf16.gmra.mrb[0].mxu0 %v303
      %v339 = vpop.f32.mrb[0].mxu0
      %v340 = vadd.f32 %v293, %v339
      %v341 = vpop.f32.mrb[0].mxu0
      %v342 = vpop.f32.mrb[0].mxu0
      %v343 = vadd.f32 %v293, %v342
      %v344 = vpop.f32.mrb[0].mxu0
      %345 = vdwg.mxu0
      %v346 = vmax.f32 %v340, 0.0
      %v347 = vmax.f32 %v343, 0.0
      %v348 = vpack.c.bf16 %v347, %v346
      %v349 = vld [vmem:[%s3] sm:$0xf]
      %v350 = vld [vmem:[%s3 + $0x4] sm:$0xf]
      %v351 = vld [vmem:[%s3 + $0x8] sm:$0xf]
      %v352 = vld [vmem:[%s3 + $0xc] sm:$0xf]
      %v353 = vld [vmem:[%s4] sm:$0x1]
      %v355 = vlaneseq
      %v356 = vshrl.u32 %v355, 7
      %v357 = vsub.s32 0, %v356
      %v358 = vrot.slane %v353, %v357
      %v364 = vunpack.c.l.b16 %v349
      %v365 = vunpack.c.l.b16 %v350
      %v366 = vunpack.c.l.b16 %v351
      %v367 = vunpack.c.l.b16 %v352
      %v368 = vpack.c.b16 %v365, %v364
      %v369 = vpack.c.b16 %v367, %v366
      %vm372 = vcmask 261120
      %v374 = vsel %vm372, %v348, 0
      %376 = vmatprep.subr.bf16.mxu0 0
      %377 = vmatpush1.bf16.msra.mxu0 %v368
      %378 = vmatprep.subr.bf16.mxu0 0
      %379 = vmatpush1.bf16.msra.mxu0 %v369
      %380 = vmatprep.subr.bf16.mxu0 0
      %381 = vmatpush1.bf16.msra.mxu0 0
      %382 = vmatprep.subr.bf16.mxu0 0
      %383 = vmatpush1.bf16.msra.mxu0 0
      %384 = vmatprep.subr.bf16.mxu0 0
      %385 = vmatpush1.bf16.msra.mxu0 0
      %386 = vmatprep.subr.bf16.mxu0 0
      %387 = vmatpush1.bf16.msra.mxu0 0
      %388 = vmatprep.subr.bf16.mxu0 0
      %389 = vmatpush1.bf16.msra.mxu0 0
      %390 = vmatprep.subr.bf16.mxu0 0
      %391 = vmatpush1.bf16.msra.mxu0 0
      %392 = vmatprep.subr.bf16.mxu0 0
      %393 = vmatpush1.bf16.msra.mxu0 0
      %394 = vmatprep.subr.bf16.mxu0 0
      %395 = vmatpush1.bf16.msra.mxu0 0
      %396 = vmatprep.subr.bf16.mxu0 0
      %397 = vmatpush1.bf16.msra.mxu0 0
      %398 = vmatprep.subr.bf16.mxu0 0
      %399 = vmatpush1.bf16.msra.mxu0 0
      %400 = vmatprep.subr.bf16.mxu0 0
      %401 = vmatpush1.bf16.msra.mxu0 0
      %402 = vmatprep.subr.bf16.mxu0 0
      %403 = vmatpush1.bf16.msra.mxu0 0
      %404 = vmatprep.subr.bf16.mxu0 0
      %405 = vmatpush1.bf16.msra.mxu0 0
      %406 = vmatprep.subr.bf16.mxu0 0
      %407 = vmatpush1.bf16.msra.mxu0 0
      %408 = vmatprep.mubr.bf16.mxu0 0
      %409 = vmatmul.mubr.bf16.gmra.mrb[0].mxu0 %v374
      %v410 = vpop.f32.mrb[0].mxu0
      %v411 = vadd.f32 %v358, %v410
      %v412 = vpop.f32.mrb[0].mxu0
      %v413 = vpop.f32.mrb[0].mxu0
      %v414 = vadd.f32 %v358, %v413
      %v415 = vpop.f32.mrb[0].mxu0
      %416 = vdwg.mxu0
      %v417 = vmax.f32 %v411, 0.0
      %v418 = vmax.f32 %v414, 0.0
      %v419 = vpack.c.bf16 %v418, %v417
      %v420 = vld [vmem:[%s5] sm:$0xf]
      %v421 = vld [vmem:[%s5 + $0x4] sm:$0xf]
      %v422 = vld [vmem:[%s5 + $0x8] sm:$0xf]
      %v423 = vld [vmem:[%s5 + $0xc] sm:$0xf]
      %v424 = vld [vmem:[%s6] sm:$0x1]
      %v426 = vlaneseq
      %v427 = vshrl.u32 %v426, 7
      %v428 = vsub.s32 0, %v427
      %v429 = vrot.slane %v424, %v428
      %v435 = vunpack.c.l.b16 %v420
      %v436 = vunpack.c.l.b16 %v421
      %v437 = vunpack.c.l.b16 %v422
      %v438 = vunpack.c.l.b16 %v423
      %v439 = vpack.c.b16 %v436, %v435
      %v440 = vpack.c.b16 %v438, %v437
      %v444 = vsel %vm372, %v419, 0
      %446 = vmatprep.subr.bf16.mxu0 0
      %447 = vmatpush1.bf16.msra.mxu0 %v439
      %448 = vmatprep.subr.bf16.mxu0 0
      %449 = vmatpush1.bf16.msra.mxu0 %v440
      %450 = vmatprep.subr.bf16.mxu0 0
      %451 = vmatpush1.bf16.msra.mxu0 0
      %452 = vmatprep.subr.bf16.mxu0 0
      %453 = vmatpush1.bf16.msra.mxu0 0
      %454 = vmatprep.subr.bf16.mxu0 0
      %455 = vmatpush1.bf16.msra.mxu0 0
      %456 = vmatprep.subr.bf16.mxu0 0
      %457 = vmatpush1.bf16.msra.mxu0 0
      %458 = vmatprep.subr.bf16.mxu0 0
      %459 = vmatpush1.bf16.msra.mxu0 0
      %460 = vmatprep.subr.bf16.mxu0 0
      %461 = vmatpush1.bf16.msra.mxu0 0
      %462 = vmatprep.subr.bf16.mxu0 0
      %463 = vmatpush1.bf16.msra.mxu0 0
      %464 = vmatprep.subr.bf16.mxu0 0
      %465 = vmatpush1.bf16.msra.mxu0 0
      %466 = vmatprep.subr.bf16.mxu0 0
      %467 = vmatpush1.bf16.msra.mxu0 0
      %468 = vmatprep.subr.bf16.mxu0 0
      %469 = vmatpush1.bf16.msra.mxu0 0
      %470 = vmatprep.subr.bf16.mxu0 0
      %471 = vmatpush1.bf16.msra.mxu0 0
      %472 = vmatprep.subr.bf16.mxu0 0
      %473 = vmatpush1.bf16.msra.mxu0 0
      %474 = vmatprep.subr.bf16.mxu0 0
      %475 = vmatpush1.bf16.msra.mxu0 0
      %476 = vmatprep.subr.bf16.mxu0 0
      %477 = vmatpush1.bf16.msra.mxu0 0
      %478 = vmatprep.mubr.bf16.mxu0 0
      %479 = vmatmul.mubr.bf16.gmra.mrb[0].mxu0 %v444
      %v480 = vpop.f32.mrb[0].mxu0
      %v481 = vadd.f32 %v429, %v480
      %v482 = vpop.f32.mrb[0].mxu0
      %v483 = vpop.f32.mrb[0].mxu0
      %v484 = vadd.f32 %v429, %v483
      %v485 = vpop.f32.mrb[0].mxu0
      %486 = vdwg.mxu0
      %vm487 = vcmask 64512
      %v488 = vsel %vm487, %v481, -inf
      %489 = vmax.xlane.f32.xlu0 %v488
      %v490 = vpop.xlane.xlu0 %489
      %v491 = vsel %vm487, %v484, -inf
      %492 = vmax.xlane.f32.xlu0 %v491
      %v493 = vpop.xlane.xlu0 %492
      %v494 = vsub.f32 %v481, %v490
      %v495 = vsub.f32 %v484, %v493
      %v496 = vmul.f32 %v494, 1.442695
      %v497 = vpow.pop %v496
      %v498 = vmul.f32 %v495, 1.442695
      %v499 = vpow.pop %v498
      %v500 = vsel %vm487, %v497, 0.0
      %501 = vadd.xlane.f32.xlu0 %v500
      %v502 = vpop.xlane.xlu0 %501
      %v503 = vsel %vm487, %v499, 0.0
      %504 = vadd.xlane.f32.xlu0 %v503
      %v505 = vpop.xlane.xlu0 %504
      %v506 = vrcp.pop %v502
      %v507 = vrcp.pop %v505
      %v508 = vmul.f32 %v497, %v506
      %v509 = vmul.f32 %v499, %v507
      %510 = vst.msk [vmem:[%s280] sm:$0xff] %vm487, %v508
      %511 = vst.msk [vmem:[%s280 + $0x8] sm:$0xff] %vm487, %v509
      %s512 = smul.u32 2, %s18
      %p513 = scmp.lt.s32.totalorder %s512, 3
      %s514 = scalar_select %p513, %s512, 3
      %s515 = smul.addr %s514, 8
      %s516 = scalar_lea.vmem %s7, %s515
      // Predicated region
      $region49: #{softmax_actor_forward.1} parent=47 // pred_check
        %p517 = pneg %p188
      $region50: #{softmax_actor_forward.1} parent=47 // pred_check_branch
        %519 = sbr.rel (%p517) target = $region52
      $region51: #{softmax_actor_forward.1} parent=47 // pred_region
        %s520 = smul.u32 2, %s18
      $region52: #{softmax_actor_forward.1} parent=47 // pred_fallthru
        _
    $region48: #{softmax_actor_forward.1} parent=5 // pred_fallthru
      _
    %p521 = scmp.le.s32.totalorder 2, %s13
    // Predicated region
    $region53: #{softmax_actor_forward.1} parent=5 // pred_check
      %p522 = pneg %p521
    $region54: #{softmax_actor_forward.1} parent=5 // pred_check_branch
      %524 = sbr.rel (%p522) target = $region56
    $region55: #{softmax_actor_forward.1} parent=5 // pred_region
      %s525 = ssub.s32 %s13, 2
      // Predicated region
      $region57: #{softmax_actor_forward.1} parent=55 // pred_check
        %p526 = pneg %p194
      $region58: #{softmax_actor_forward.1} parent=55 // pred_check_branch
        %528 = sbr.rel (%p526) target = $region60
      $region59: #{softmax_actor_forward.1} parent=55 // pred_region
        %s529 = smul.u32 2, %s19
        %p530 = scmp.lt.s32.totalorder %s529, 3
        %s531 = scalar_select %p530, %s529, 3
        %s532 = smul.addr %s531, 8
        %s533 = scalar_lea.vmem %s7, %s532
      $region60: #{softmax_actor_forward.1} parent=55 // pred_fallthru
        _
    $region56: #{softmax_actor_forward.1} parent=5 // pred_fallthru
      _
  $region6: #{softmax_actor_forward.1} parent=0 // loop_footer
    %s17 = sadd.s32 1, %s13
  $region7: #{softmax_actor_forward.1} parent=0 // loop_footer_branch
    %12 = sbr.rel target = $region3
  $region8: #{softmax_actor_forward.1} parent=0 // loop_exit
    _

</llo_original>
